<compile_context>
chip_gen: v6e
topology: v6e:2x2x1
jax: 0.10.0
libtpu: 0.0.40
codegen_flags: <defaults>
</compile_context>

<pallas_src>
import jax
import jax.numpy as jnp
from jax.experimental import pallas as pl
from jax.experimental.pallas import tpu as pltpu


def _sample_part_sub_kernel(win_ref, off_ref, o_ref):
    # win_ref: (Bt, P, Dt)  window rows  x[:, back:forw, :]
    # off_ref: (Bt, 1, Dt)  reference row x[:, offset, :]
    # The subtract broadcasts the single reference row over the P window rows.
    o_ref[...] = win_ref[...] - off_ref[...]


def _pick_lane_tile(D, P, itemsize, target_bytes):
    """Tile D only when it is 128-aligned AND a single-batch block is too big."""
    if D % 128 != 0 or P * D * itemsize <= target_bytes:
        return D
    best = 128
    for d in range(128, D + 1, 128):
        if D % d == 0 and P * d * itemsize <= target_bytes:
            best = d
    return best


def _pick_batch_tile(B, bytes_per_batch, target_bytes):
    divisors = [d for d in range(1, B + 1) if B % d == 0]
    fitting = [d for d in divisors if d * bytes_per_batch <= target_bytes] or [1]
    bt = fitting[-1]
    # Prefer >= 2 grid steps so both TensorCores on v7x get work
    # (neutral on single-TC v5e/v6e: per-step overhead is only ~0.35 us).
    if bt == B and B > 1:
        smaller = [d for d in fitting if d < B]
        if smaller:
            bt = smaller[-1]
    return bt


def sample_part(x, part, offset, *, target_block_bytes=2 * 1024 * 1024):
    """JAX/Pallas equivalent of SamplePart_Layer(part, offset)(x).

    x      : jnp.ndarray of shape (B, T, D)
    part   : (back, forw) python ints
    offset : python int or None
    """
    back, forw = int(part[0]), int(part[1])
    B, T, D = x.shape

    # Normalize negative indices (python/PyTorch slicing semantics) and clamp.
    if back < 0:
        back += T
    if forw < 0:
        forw += T
    back = max(0, min(back, T))
    forw = max(0, min(forw, T))
    P = forw - back

    if offset is not None:
        offset = int(offset)
        if offset < 0:
            offset += T
        if not (0 <= offset < T):
            raise ValueError(
                f"offset={offset} out of range for time window of length {T}"
            )

    if P <= 0:
        # Empty window: nothing to compute.
        return x[:, back:forw]

    if offset is None:
        # Pure static slice, no arithmetic: let XLA emit it directly instead
        # of paying an extra HBM round-trip through a copy kernel.
        return x[:, back:forw]

    itemsize = jnp.dtype(x.dtype).itemsize
    Dt = _pick_lane_tile(D, P, itemsize, target_block_bytes)
    Bt = _pick_batch_tile(B, P * Dt * itemsize, target_block_bytes)
    grid = (B // Bt, D // Dt)

    # Only feed the kernel what it uses: window rows + the single reference row.
    window = x[:, back:forw, :]            # (B, P, D)
    off_row = x[:, offset:offset + 1, :]   # (B, 1, D)

    # Rough double-buffered VMEM footprint: 2 * (win_in + ref_in + out).
    est_vmem = 2 * (Bt * P * Dt + Bt * Dt + Bt * P * Dt) * itemsize
    compiler_kwargs = dict(
        # Both grid axes are independent -> shard across TensorCores (v7x);
        # harmless on single-TC v5e/v6e.
        dimension_semantics=("parallel", "parallel"),
    )
    if est_vmem > 12 * 1024 * 1024:
        # Rare fallback (huge P*D with non-128-multiple D): raise the scoped
        # VMEM limit above v5e's 16 MiB default.
        compiler_kwargs["vmem_limit_bytes"] = min(2 * est_vmem, 64 * 1024 * 1024)

    out = pl.pallas_call(
        _sample_part_sub_kernel,
        out_shape=jax.ShapeDtypeStruct((B, P, D), x.dtype),
        grid_spec=pltpu.PrefetchScalarGridSpec(
            num_scalar_prefetch=0,
            grid=grid,
            in_specs=[
                pl.BlockSpec((Bt, P, Dt), lambda b, d: (b, 0, d)),
                pl.BlockSpec((Bt, 1, Dt), lambda b, d: (b, 0, d)),
            ],
            out_specs=pl.BlockSpec((Bt, P, Dt), lambda b, d: (b, 0, d)),
        ),
        compiler_params=pltpu.CompilerParams(**compiler_kwargs),
    )(window, off_row)
    return out


def _reference(x, part, offset):
    back, forw = part
    if offset is not None:
        x = x - x[:, offset][:, None, :]
    return x[:, back:forw]


if __name__ == "__main__":
    key = jax.random.PRNGKey(0)
    B, T, D = 2, 8, 32
    x = jax.random.normal(key, (B, T, D), dtype=jnp.float32)

    part = (2, 6)   # back=2, forw=6 -> output window length 4
    offset = 0      # subtract the first sample of the window

    out = jax.block_until_ready(sample_part(x, part, offset))
    ref = _reference(x, part, offset)
    assert out.shape == (B, part[1] - part[0], D), out.shape
    assert jnp.allclose(out, ref, atol=1e-6, rtol=1e-6), "mismatch (offset=0)"

    # non-zero reference row
    out3 = jax.block_until_ready(sample_part(x, part, 3))
    ref3 = _reference(x, part, 3)
    assert jnp.allclose(out3, ref3, atol=1e-6, rtol=1e-6), "mismatch (offset=3)"

    # offset=None path: pure slice, handled without a kernel per perf review
    out2 = jax.block_until_ready(sample_part(x, part, None))
    ref2 = _reference(x, part, None)
    assert jnp.allclose(out2, ref2, atol=1e-6, rtol=1e-6), "mismatch (offset=None)"

    print("KERNEL_OK")
</pallas_src>

<mosaic_0001>
module attributes {stable_mosaic.version = 11 : i64} {
  func.func @_sample_part_sub_kernel(%arg0: i32, %arg1: i32, %arg2: memref<1x4x32xf32, #tpu.memory_space<vmem>>, %arg3: memref<1x1x32xf32, #tpu.memory_space<vmem>>, %arg4: memref<1x4x32xf32, #tpu.memory_space<vmem>>) attributes {dimension_semantics = [#tpu.dimension_semantics<parallel>, #tpu.dimension_semantics<parallel>], iteration_bounds = array<i64: 2, 1>, scalar_prefetch = 0 : i64, scratch_operands = 0 : i64, tpu.core_type = #tpu.core_type<tc>, window_params = [{transform_indices = @transform_0, window_bounds = array<i64: 1, 4, 32>}, {transform_indices = @transform_1, window_bounds = array<i64: 1, 1, 32>}, {transform_indices = @transform_2, window_bounds = array<i64: 1, 4, 32>}]} {
    %c0 = arith.constant 0 : index
    %c0_0 = arith.constant 0 : index
    %c0_1 = arith.constant 0 : index
    %0 = vector.load %arg2[%c0, %c0_0, %c0_1] : memref<1x4x32xf32, #tpu.memory_space<vmem>>, vector<1x4x32xf32>
    %c0_2 = arith.constant 0 : index
    %c0_3 = arith.constant 0 : index
    %c0_4 = arith.constant 0 : index
    %1 = vector.load %arg3[%c0_2, %c0_3, %c0_4] : memref<1x1x32xf32, #tpu.memory_space<vmem>>, vector<1x1x32xf32>
    %2 = vector.broadcast %1 : vector<1x1x32xf32> to vector<1x4x32xf32>
    %3 = arith.subf %0, %2 : vector<1x4x32xf32>
    %c0_5 = arith.constant 0 : index
    %c0_6 = arith.constant 0 : index
    %c0_7 = arith.constant 0 : index
    %4 = vector.load %arg4[%c0_5, %c0_6, %c0_7] : memref<1x4x32xf32, #tpu.memory_space<vmem>>, vector<1x4x32xf32>
    tpu.vector_store %arg4[%c0_5, %c0_6, %c0_7], %3 {strides = array<i32>} : memref<1x4x32xf32, #tpu.memory_space<vmem>>, vector<1x4x32xf32>,
    return
  }
  func.func @transform_0(%arg0: i32, %arg1: i32) -> (i32, i32, i32) {
    %c0_i32 = arith.constant 0 : i32
    %c0_i32_0 = arith.constant 0 : i32
    return %arg0, %c0_i32, %arg1 : i32, i32, i32
  }
  func.func @transform_1(%arg0: i32, %arg1: i32) -> (i32, i32, i32) {
    %c0_i32 = arith.constant 0 : i32
    %c0_i32_0 = arith.constant 0 : i32
    return %arg0, %c0_i32, %arg1 : i32, i32, i32
  }
  func.func @transform_2(%arg0: i32, %arg1: i32) -> (i32, i32, i32) {
    %c0_i32 = arith.constant 0 : i32
    %c0_i32_0 = arith.constant 0 : i32
    return %arg0, %c0_i32, %arg1 : i32, i32, i32
  }
}

</mosaic_0001>

<llo_original>
// kernel: tpu_custom_call.1
$region0: #{tpu_custom_call.1}
  #allocation0 [shape = 'u32[]', space=smem, size = 0x4, offset = 0x4, fixed_abs, tag = 'smem constant byte address 0x4 - core index']
  #allocation1 [shape = 'u32[144,128]{1,0:T(1,128)}', space=vmem, size = 0x12000, scoped, tag = 'internal scratch']
  %s0 = inlined_call_operand.hbm [shape: f32[2,4,32], index: 0, kind: input, shape index: {}]
  %s1 = inlined_call_operand.hbm [shape: f32[2,1,32], index: 1, kind: input, shape index: {}]
  %s2 = inlined_call_operand.hbm [shape: f32[2,4,32], index: 2, kind: output, shape index: {}]
  %s3 = sld [smem:[#allocation0]]
  $region49: #{tpu_custom_call.1} parent=0
    _
  %s5 = ssub.s32 1, %s3
  %s6 = scalar_select 0, %s5, %s3
  $region1: #{tpu_custom_call.1} parent=0
    #allocation2 [shape = 'u8[4096]{0}', space=vmem, size = 0x1000, scoped, tag = 'input window, operand 0']
    #allocation3 [shape = 's32[2]{0}', space=sflag, size = 0x8, scoped, tag = 'scoped memory for tpu_custom_call.1']
    #allocation4 [shape = 's32[2]{0}', space=sflag, size = 0x8, scoped, tag = 'scoped memory for tpu_custom_call.1']
    #allocation5 [shape = 'u8[1024]{0}', space=vmem, size = 0x400, scoped, tag = 'input window, operand 1']
    #allocation6 [shape = 's32[2]{0}', space=sflag, size = 0x8, scoped, tag = 'scoped memory for tpu_custom_call.1']
    #allocation7 [shape = 'u8[4096]{0}', space=vmem, size = 0x1000, scoped, tag = 'output window, operand 0']
    %7 = vsyncpa [#allocation3], 0
    %s8 = scalar_lea.sflag [#allocation3], 1
    %9 = vsyncpa %s8, 0
    %10 = vsyncpa [#allocation6], 0
    %s11 = scalar_lea.sflag [#allocation6], 1
    %12 = vsyncpa %s11, 0
    %13 = vsyncpa [#allocation4], 0
    %s14 = scalar_lea.sflag [#allocation4], 1
    %15 = vsyncpa %s14, 0
    loop: start=0, step=1, limit=4
    $region2: #{tpu_custom_call.1} parent=1 // loop_pre_header
      _
    $region3: #{tpu_custom_call.1} parent=1 // loop_header
      %s17 = sphi 0, %s21
      %p18 = scmp.ge.s32.totalorder %s17, 4
      %s24 = sphi 0, %s36
      %s25 = sphi 0, %s32
      %s26 = sphi 0, %s24
      %s27 = sphi 0, %s25
      %s28 = sphi 0, %s26
      %s29 = sphi 0, %s27
      %s41 = sphi 0, %s43
      %s44 = sphi 0, %s41
      %s45 = sphi 0, %s44
      %s61 = sphi 0, %s45
      %s69 = sphi 0, %s71
      %s72 = sphi 0, %s69
      %s73 = sphi 0, %s72
      %s89 = sphi 0, %s73
      %s97 = sphi 0, %s99
      %s100 = sphi 0, %s97
      %s101 = sphi 0, %s100
      %s117 = sphi 0, %s101
    $region4: #{tpu_custom_call.1} parent=1 // loop_header_branch
      %20 = sbr.rel (%p18) target = $region8
    $region5: #{tpu_custom_call.1} parent=1 // loop_body
      %s22 = ssub.s32 %s17, 1
      %s23 = ssub.s32 %s17, 2
      %s30 = sadd.s32 1, %s25
      %p31 = scmp.ge.s32.totalorder %s30, 1
      %s32 = scalar_select %p31, 0, %s30
      %s33 = sadd.s32 1, %s24
      %s34 = scalar_select %p31, %s33, %s24
      %p35 = scmp.ge.s32.totalorder %s34, 2
      %s36 = scalar_select %p35, 0, %s34
      %s37 = ssub.s32 %s24, %s36
      %s38 = ssub.s32 %s25, %s32
      %s39 = sor.u32 %s37, %s38
      %p40 = scmp.eq.s32.totalorder %s39, 0
      %s42 = sadd.s32 %s41, 1
      %s43 = scalar_select %p40, %s41, %s42
      %p46 = pneg %p40
      %p47 = scmp.eq.s32.totalorder %s17, 1
      %p48 = por %p46, %p47
      %p49 = scmp.ne.s32.totalorder %s41, %s44
      %p50 = scmp.eq.s32.totalorder %s17, 0
      %p51 = por %p49, %p50
      %p52 = scmp.ne.s32.totalorder %s41, %s44
      %p53 = scmp.eq.s32.totalorder %s22, 1
      %p54 = por %p52, %p53
      %p55 = scmp.ne.s32.totalorder %s44, %s45
      %p56 = scmp.eq.s32.totalorder %s22, 0
      %p57 = por %p55, %p56
      %p58 = scmp.ne.s32.totalorder %s44, %s45
      %p59 = scmp.eq.s32.totalorder %s23, 1
      %p60 = por %p58, %p59
      %p62 = scmp.ne.s32.totalorder %s45, %s61
      %p63 = scmp.eq.s32.totalorder %s23, 0
      %p64 = por %p62, %p63
      %s65 = ssub.s32 %s24, %s36
      %s66 = ssub.s32 %s25, %s32
      %s67 = sor.u32 %s65, %s66
      %p68 = scmp.eq.s32.totalorder %s67, 0
      %s70 = sadd.s32 %s69, 1
      %s71 = scalar_select %p68, %s69, %s70
      %p74 = pneg %p68
      %p75 = scmp.eq.s32.totalorder %s17, 1
      %p76 = por %p74, %p75
      %p77 = scmp.ne.s32.totalorder %s69, %s72
      %p78 = scmp.eq.s32.totalorder %s17, 0
      %p79 = por %p77, %p78
      %p80 = scmp.ne.s32.totalorder %s69, %s72
      %p81 = scmp.eq.s32.totalorder %s22, 1
      %p82 = por %p80, %p81
      %p83 = scmp.ne.s32.totalorder %s72, %s73
      %p84 = scmp.eq.s32.totalorder %s22, 0
      %p85 = por %p83, %p84
      %p86 = scmp.ne.s32.totalorder %s72, %s73
      %p87 = scmp.eq.s32.totalorder %s23, 1
      %p88 = por %p86, %p87
      %p90 = scmp.ne.s32.totalorder %s73, %s89
      %p91 = scmp.eq.s32.totalorder %s23, 0
      %p92 = por %p90, %p91
      %s93 = ssub.s32 %s24, %s36
      %s94 = ssub.s32 %s25, %s32
      %s95 = sor.u32 %s93, %s94
      %p96 = scmp.eq.s32.totalorder %s95, 0
      %s98 = sadd.s32 %s97, 1
      %s99 = scalar_select %p96, %s97, %s98
      %p102 = pneg %p96
      %p103 = scmp.eq.s32.totalorder %s17, 1
      %p104 = por %p102, %p103
      %p105 = scmp.ne.s32.totalorder %s97, %s100
      %p106 = scmp.eq.s32.totalorder %s17, 0
      %p107 = por %p105, %p106
      %p108 = scmp.ne.s32.totalorder %s97, %s100
      %p109 = scmp.eq.s32.totalorder %s22, 1
      %p110 = por %p108, %p109
      %p111 = scmp.ne.s32.totalorder %s100, %s101
      %p112 = scmp.eq.s32.totalorder %s22, 0
      %p113 = por %p111, %p112
      %p114 = scmp.ne.s32.totalorder %s100, %s101
      %p115 = scmp.eq.s32.totalorder %s23, 1
      %p116 = por %p114, %p115
      %p118 = scmp.ne.s32.totalorder %s101, %s117
      %p119 = scmp.eq.s32.totalorder %s23, 0
      %p120 = por %p118, %p119
      %p121 = scmp.le.s32.totalorder 1, %s17
      %p122 = scmp.lt.s32.totalorder %s17, 3
      %p123 = pnand %p121, %p122
      %p124 = pneg %p123
      // Predicated region
      $region9: #{tpu_custom_call.1} parent=5 // pred_check
        _
      $region10: #{tpu_custom_call.1} parent=5 // pred_check_branch
        %126 = sbr.rel (%p123) target = $region12
      $region11: #{tpu_custom_call.1} parent=5 // pred_region
        %s127 = ssub.s32 %s17, 1
      $region12: #{tpu_custom_call.1} parent=5 // pred_fallthru
        _
      %p128 = scmp.lt.s32.totalorder %s17, 2
      // Predicated region
      $region13: #{tpu_custom_call.1} parent=5 // pred_check
        %p129 = pneg %p128
      $region14: #{tpu_custom_call.1} parent=5 // pred_check_branch
        %131 = sbr.rel (%p129) target = $region16
      $region15: #{tpu_custom_call.1} parent=5 // pred_region
        // Predicated region
        $region17: #{tpu_custom_call.1} parent=15 // pred_check
          %p132 = pneg %p51
        $region18: #{tpu_custom_call.1} parent=15 // pred_check_branch
          %134 = sbr.rel (%p132) target = $region20
        $region19: #{tpu_custom_call.1} parent=15 // pred_region
          %s135 = sand.u32 %s41, 1
          %s136 = scalar_lea.sflag [#allocation3], %s135
          %s137 = sand.u32 %s41, 1
          %s138 = smul.addr %s137, 4
          %s139 = scalar_lea.vmem [#allocation2], %s138
          %s141 = ssub.s32 64, 64
          %142 = vsyncadd %s136, %s141
          %s143 = sadd.s32 %s25, %s24
          %s144 = smul.addr %s143, 64
          %s145 = scalar_lea.hbm %s0, %s144
          %s147 = sshll.u32 %s139, 4
          %s148 = int_to_ptr.vmem [resolvable:$true] %s147
          %150 = dma.hbm_to_vmem [thread:$0]  %s145, 64, %s148, %s136
        $region20: #{tpu_custom_call.1} parent=15 // pred_fallthru
          _
        // Predicated region
        $region21: #{tpu_custom_call.1} parent=15 // pred_check
          %p151 = pneg %p79
        $region22: #{tpu_custom_call.1} parent=15 // pred_check_branch
          %153 = sbr.rel (%p151) target = $region24
        $region23: #{tpu_custom_call.1} parent=15 // pred_region
          %s154 = sand.u32 %s69, 1
          %s155 = scalar_lea.sflag [#allocation6], %s154
          %s156 = sand.u32 %s69, 1
          %s157 = scalar_lea.vmem [#allocation5], %s156
          %s159 = ssub.s32 16, 16
          %160 = vsyncadd %s155, %s159
          %s161 = sadd.s32 %s25, %s24
          %s162 = smul.addr %s161, 16
          %s163 = scalar_lea.hbm %s1, %s162
          %s165 = sshll.u32 %s157, 4
          %s166 = int_to_ptr.vmem [resolvable:$true] %s165
          %168 = dma.hbm_to_vmem [thread:$0]  %s163, 16, %s166, %s155
        $region24: #{tpu_custom_call.1} parent=15 // pred_fallthru
          _
      $region16: #{tpu_custom_call.1} parent=5 // pred_fallthru
        _
      %p169 = scmp.le.s32.totalorder 1, %s17
      %p170 = scmp.lt.s32.totalorder %s17, 3
      %p171 = pnand %p169, %p170
      %p172 = pneg %p171
      // Predicated region
      $region25: #{tpu_custom_call.1} parent=5 // pred_check
        _
      $region26: #{tpu_custom_call.1} parent=5 // pred_check_branch
        %174 = sbr.rel (%p171) target = $region28
      $region27: #{tpu_custom_call.1} parent=5 // pred_region
        %s175 = ssub.s32 %s17, 1
        %s176 = sand.u32 %s44, 1
        %s177 = scalar_lea.sflag [#allocation3], %s176
        %s178 = sand.u32 %s44, 1
        %s179 = smul.addr %s178, 4
        %s180 = scalar_lea.vmem [#allocation2], %s179
        // Predicated region
        $region29: #{tpu_custom_call.1} parent=27 // pred_check
          %p181 = pneg %p57
        $region30: #{tpu_custom_call.1} parent=27 // pred_check_branch
          %183 = sbr.rel (%p181) target = $region32
        $region31: #{tpu_custom_call.1} parent=27 // pred_region
          %184 = dma.done %s177, 64
        $region32: #{tpu_custom_call.1} parent=27 // pred_fallthru
          _
        %s185 = sand.u32 %s72, 1
        %s186 = scalar_lea.sflag [#allocation6], %s185
        %s187 = sand.u32 %s72, 1
        %s188 = scalar_lea.vmem [#allocation5], %s187
        // Predicated region
        $region33: #{tpu_custom_call.1} parent=27 // pred_check
          %p189 = pneg %p85
        $region34: #{tpu_custom_call.1} parent=27 // pred_check_branch
          %191 = sbr.rel (%p189) target = $region36
        $region35: #{tpu_custom_call.1} parent=27 // pred_region
          %192 = dma.done %s186, 16
        $region36: #{tpu_custom_call.1} parent=27 // pred_fallthru
          _
        %s193 = sand.u32 %s44, 1
        %s194 = scalar_lea.sflag [#allocation3], %s193
        %s195 = sand.u32 %s44, 1
        %s196 = smul.addr %s195, 4
        %s197 = scalar_lea.vmem [#allocation2], %s196
        %p198 = pneg %p57
        %p199 = pneg %p54
        %s200 = sand.u32 %s72, 1
        %s201 = scalar_lea.sflag [#allocation6], %s200
        %s202 = sand.u32 %s72, 1
        %s203 = scalar_lea.vmem [#allocation5], %s202
        %p204 = pneg %p85
        %p205 = pneg %p82
        %p206 = pneg %p113
        %p207 = pneg %p110
        %s208 = sand.u32 %s100, 1
        %s209 = scalar_lea.sflag [#allocation4], %s208
        %s210 = sand.u32 %s100, 1
        %s211 = smul.addr %s210, 4
        %s212 = scalar_lea.vmem [#allocation7], %s211
        %v213 = vld [vmem:[%s180] sm:$0xf]
        %v214 = vld [vmem:[%s188] sm:$0x1]
        %v216 = vlaneseq
        %v217 = vshrl.u32 %v216, 7
        %v218 = vsub.s32 0, %v217
        %v219 = vrot.slane %v214, %v218
        %v221 = vsub.f32 %v213, %v219
        %vm222 = vcmask 257024
        %223 = vst.msk [vmem:[%s212] sm:$0xf] %vm222, %v221
        %s224 = sand.u32 %s100, 1
        %s225 = scalar_lea.sflag [#allocation4], %s224
        %s226 = sand.u32 %s100, 1
        %s227 = smul.addr %s226, 4
        %s228 = scalar_lea.vmem [#allocation7], %s227
        // Predicated region
        $region37: #{tpu_custom_call.1} parent=27 // pred_check
          %p229 = pneg %p110
        $region38: #{tpu_custom_call.1} parent=27 // pred_check_branch
          %231 = sbr.rel (%p229) target = $region40
        $region39: #{tpu_custom_call.1} parent=27 // pred_region
          %s233 = ssub.s32 64, 64
          %234 = vsyncadd %s225, %s233
          %s235 = sadd.s32 %s27, %s26
          %s236 = smul.addr %s235, 64
          %s237 = scalar_lea.hbm %s2, %s236
          %s239 = sshll.u32 %s228, 4
          %s240 = int_to_ptr.vmem [resolvable:$true] %s239
          %242 = dma.vmem_to_hbm [thread:$0]  %s240, 64, %s237, %s225
        $region40: #{tpu_custom_call.1} parent=27 // pred_fallthru
          _
      $region28: #{tpu_custom_call.1} parent=5 // pred_fallthru
        _
      %p243 = scmp.le.s32.totalorder 2, %s17
      // Predicated region
      $region41: #{tpu_custom_call.1} parent=5 // pred_check
        %p244 = pneg %p243
      $region42: #{tpu_custom_call.1} parent=5 // pred_check_branch
        %246 = sbr.rel (%p244) target = $region44
      $region43: #{tpu_custom_call.1} parent=5 // pred_region
        %s247 = ssub.s32 %s17, 2
        // Predicated region
        $region45: #{tpu_custom_call.1} parent=43 // pred_check
          %p248 = pneg %p116
        $region46: #{tpu_custom_call.1} parent=43 // pred_check_branch
          %250 = sbr.rel (%p248) target = $region48
        $region47: #{tpu_custom_call.1} parent=43 // pred_region
          %s251 = sand.u32 %s101, 1
          %s252 = scalar_lea.sflag [#allocation4], %s251
          %s253 = sand.u32 %s101, 1
          %s254 = smul.addr %s253, 4
          %s255 = scalar_lea.vmem [#allocation7], %s254
          %256 = dma.done %s252, 64
        $region48: #{tpu_custom_call.1} parent=43 // pred_fallthru
          _
      $region44: #{tpu_custom_call.1} parent=5 // pred_fallthru
        _
    $region6: #{tpu_custom_call.1} parent=1 // loop_footer
      %s21 = sadd.s32 1, %s17
    $region7: #{tpu_custom_call.1} parent=1 // loop_footer_branch
      %16 = sbr.rel target = $region3
    $region8: #{tpu_custom_call.1} parent=1 // loop_exit
      _
    %257 = vsyncpa [#allocation3], 1
    %s258 = scalar_lea.sflag [#allocation3], 1
    %259 = vsyncpa %s258, 1
    %260 = vsyncpa [#allocation6], 1
    %s261 = scalar_lea.sflag [#allocation6], 1
    %262 = vsyncpa %s261, 1
    %263 = vsyncpa [#allocation4], 1
    %s264 = scalar_lea.sflag [#allocation4], 1
    %265 = vsyncpa %s264, 1

</llo_original>
